<compile_context>
chip_gen: v7x
topology: tpu7x:2x2x1
jax: 0.10.0
libtpu: 0.0.40
codegen_flags: <defaults>
</compile_context>

<pallas_src>
import functools

import jax
import jax.numpy as jnp
from jax import lax
from jax.experimental import pallas as pl
from jax.experimental.pallas import tpu as pltpu


# ---------------------------------------------------------------------------
# FLoRA delta-weight construction (tiny tensordot chain over the rank factors).
# ---------------------------------------------------------------------------
def flora_delta_weight(param_G, param_0, param_1, param_2, param_3, scale):
    # param_G: (r0, r1, r2, r3)
    # param_0: (Cin, r0), param_1: (Cout, r1), param_2: (kH, r2), param_3: (kW, r3)
    t = jnp.tensordot(param_G, param_0, axes=[[0], [1]])   # (r1, r2, r3, Cin)
    t = jnp.tensordot(t, param_1, axes=[[0], [1]])         # (r2, r3, Cin, Cout)
    t = jnp.tensordot(t, param_2, axes=[[0], [1]])         # (r3, Cin, Cout, kH)
    t = jnp.tensordot(t, param_3, axes=[[0], [1]])         # (Cin, Cout, kH, kW)
    return scale * jnp.swapaxes(t, 0, 1)                   # (Cout, Cin, kH, kW)


def _round_up(x, m):
    return -(-x // m) * m


# ---------------------------------------------------------------------------
# Pallas kernel: transposed im2col + swapped-orientation MXU matmul.
# ---------------------------------------------------------------------------
def _conv_kernel(x_ref, w_ref, b_ref, o_ref, col_ref, *, kh, kw, wp):
    # x_ref  : (Bblk, Cin, L)   flattened zero-padded input rows (compute dtype)
    # w_ref  : (Cout, Kpad)     folded base+FLoRA weight, K zero-padded
    # b_ref  : (Cout, 1)        bias, f32
    # o_ref  : (Bblk, Cout, M)  lane-dense output, M = round_up(Hout*Wp, 128)
    # col_ref: (Kpad, M)        transposed im2col scratch (compute dtype)
    block_b, cin, _ = x_ref.shape
    k_pad, m_ext = col_ref.shape
    k_total = kh * kw * cin

    # Zero the K-padding rows every invocation: the scratch persists across grid
    # steps (and is per-core under megacore), so a pl.when(pid == 0) guard would
    # leave stale (possibly NaN) VMEM on cores that never execute pid 0.
    if k_total < k_pad:
        col_ref[k_total:, :] = jnp.zeros((k_pad - k_total, m_ext), col_ref.dtype)

    def one_image(b):
        xb = x_ref.at[b]                                    # (Cin, L) ref view
        # Transposed im2col: tap (i, j) is a single contiguous lane-dense slab.
        # Column m = r*Wp + c of col holds input pixel (i + r, j + c).
        for i in range(kh):
            for j in range(kw):
                k0 = (i * kw + j) * cin
                start = i * wp + j
                col_ref[k0:k0 + cin, :] = xb[:, start:start + m_ext]
        # Swapped GEMM: (Cout, Kpad) x (Kpad, M) -> lane-dense (Cout, M), f32 acc.
        acc = jnp.dot(w_ref[...], col_ref[...],
                      preferred_element_type=jnp.float32)
        acc = acc + b_ref[...]                              # (Cout, 1) broadcast
        o_ref[b] = acc.astype(o_ref.dtype)

    if block_b == 1:
        one_image(0)
    else:
        # Bound vreg live ranges for multi-image steps (no full Python unroll).
        def body(b, carry):
            one_image(b)
            return carry
        lax.fori_loop(0, block_b, body, 0)


def _pick_block_b(n):
    # Keep >= 2 grid steps so megacore chips (2 TCs) both get work on the
    # "parallel" axis.
    # TODO(synk): on single-TC chips (v5e/v6e) prefer block_b = n (one grid
    #             step) when the block fits the scoped VMEM budget.
    if n < 2:
        return 1
    b = n // 2
    while n % b:
        b -= 1
    return b


def flora_conv2d_forward(x, w_base, b_base, w_flora, *, stride=1, padding=1,
                         compute_dtype=jnp.bfloat16, block_b=None):
    """x: NCHW, w_*: OIHW, returns NCHW (matches PyTorch F.conv2d conventions)."""
    assert stride == 1
    n, cin, h, w = x.shape
    cout, cin_w, kh, kw = w_base.shape
    assert cin_w == cin
    p = padding
    h_out = h + 2 * p - kh + 1
    w_out = w + 2 * p - kw + 1
    hp, wp = h + 2 * p, w + 2 * p

    k_total = kh * kw * cin
    k_pad = _round_up(k_total, 128)                 # MXU/operand-load aligned K
    m_ext = _round_up(h_out * wp, 128)              # padded-stride M, lane aligned
    max_start = (kh - 1) * wp + (kw - 1)
    l_pad = _round_up(max_start + m_ext, 128)       # flattened input lane length

    if block_b is None:
        block_b = _pick_block_b(n)
    assert n % block_b == 0

    # Input: NCHW, spatial zero-pad, flatten (Hp, Wp) -> Hp*Wp on lanes, then pad
    # the lane dim so every tap's contiguous slice stays in bounds.
    x_pad = jnp.pad(x, ((0, 0), (0, 0), (p, p), (p, p)))
    x_flat = x_pad.reshape(n, cin, hp * wp)
    x_flat = jnp.pad(x_flat, ((0, 0), (0, 0), (0, l_pad - hp * wp)))
    x_flat = x_flat.astype(compute_dtype)

    # Fold FLoRA delta into the base weight in f32 (dropout == Identity -> exact),
    # lay out as (Cout, K) with K ordered (i, j, c), zero-pad K, cast to bf16.
    # (For stricter delta fidelity keep compute_dtype=jnp.float32.)
    w_comb = w_base + w_flora
    w_mat = jnp.transpose(w_comb, (0, 2, 3, 1)).reshape(cout, k_total)
    w_mat = jnp.pad(w_mat, ((0, 0), (0, k_pad - k_total))).astype(compute_dtype)
    bias = b_base.reshape(cout, 1).astype(jnp.float32)

    kernel = functools.partial(_conv_kernel, kh=kh, kw=kw, wp=wp)

    out_flat = pl.pallas_call(
        kernel,
        out_shape=jax.ShapeDtypeStruct((n, cout, m_ext), x.dtype),
        grid_spec=pltpu.PrefetchScalarGridSpec(
            num_scalar_prefetch=0,
            grid=(n // block_b,),
            in_specs=[
                pl.BlockSpec((block_b, cin, l_pad), lambda b: (b, 0, 0)),
                pl.BlockSpec((cout, k_pad), lambda b: (0, 0)),
                pl.BlockSpec((cout, 1), lambda b: (0, 0)),
            ],
            out_specs=pl.BlockSpec((block_b, cout, m_ext), lambda b: (b, 0, 0)),
            scratch_shapes=[pltpu.VMEM((k_pad, m_ext), compute_dtype)],
        ),
        compiler_params=pltpu.CompilerParams(
            dimension_semantics=("parallel",)),
    )(x_flat, w_mat, bias)

    # Valid outputs live at columns m = r*Wp + c with c < Wout; drop the
    # padded-stride "don't care" columns.  Already channel-major: no transpose.
    out = out_flat[:, :, :h_out * wp].reshape(n, cout, h_out, wp)
    return out[:, :, :, :w_out]


if __name__ == "__main__":
    # Small shapes consistent with a Conv2D FLoRA wrapper:
    #   base_layer = nn.Conv2d(4, 8, kernel_size=3, stride=1, padding=1)
    #   flora_cfg  = dict(N=4, r=[4, 4, 2, 2], scale=1.0, drop_rate=0.0)
    N, Cin, H, W = 2, 4, 16, 16
    Cout, KH, KW = 8, 3, 3
    r = (4, 4, 2, 2)
    scale = 1.0
    stride, padding = 1, 1

    key = jax.random.PRNGKey(0)
    ks = jax.random.split(key, 8)
    x = jax.random.normal(ks[0], (N, Cin, H, W), jnp.float32)
    w_base = 0.1 * jax.random.normal(ks[1], (Cout, Cin, KH, KW), jnp.float32)
    b_base = 0.1 * jax.random.normal(ks[2], (Cout,), jnp.float32)
    # FLoRA rank factors. (Reference init_parameters zeroes param_G, which would
    # make the delta conv identically zero; use nonzero deterministic values so
    # the FLoRA path is actually exercised.)
    param_G = jax.random.normal(ks[3], r, jnp.float32)
    param_0 = jax.random.normal(ks[4], (Cin, r[0]), jnp.float32)
    param_1 = jax.random.normal(ks[5], (Cout, r[1]), jnp.float32)
    param_2 = jax.random.normal(ks[6], (KH, r[2]), jnp.float32)
    param_3 = jax.random.normal(ks[7], (KW, r[3]), jnp.float32)

    w_flora = flora_delta_weight(param_G, param_0, param_1, param_2, param_3, scale)

    out = flora_conv2d_forward(x, w_base, b_base, w_flora,
                               stride=stride, padding=padding)
    out = jax.block_until_ready(out)

    # Reference: same math (folded weight, bf16 operands, f32 accumulation) via
    # XLA's conv, so only f32 summation-order differences remain.  The fold
    # conv(x, Wb) + conv(x, Wf) == conv(x, Wb + Wf) is exact since flora_dropout
    # is Identity; bf16 operands are the intentional MXU-native precision choice
    # (f32 accumulation preserved).
    dn = jax.lax.conv_dimension_numbers(x.shape, w_base.shape,
                                        ("NCHW", "OIHW", "NCHW"))
    x_c = x.astype(jnp.bfloat16)
    w_c = (w_base + w_flora).astype(jnp.bfloat16)
    ref = (jax.lax.conv_general_dilated(
               x_c, w_c, (stride, stride), [(padding, padding)] * 2,
               dimension_numbers=dn, preferred_element_type=jnp.float32)
           + b_base[None, :, None, None])

    assert out.shape == (N, Cout, H, W), out.shape
    assert jnp.allclose(out, ref, atol=2e-3, rtol=2e-3), \
        float(jnp.max(jnp.abs(out - ref)))
    print("KERNEL_OK")
</pallas_src>

<mosaic_0001>
module attributes {stable_mosaic.version = 11 : i64} {
  func.func @_conv_kernel(%arg0: i32, %arg1: memref<1x4x512xbf16, #tpu.memory_space<vmem>>, %arg2: memref<8x128xbf16, #tpu.memory_space<vmem>>, %arg3: memref<8x1xf32, #tpu.memory_space<vmem>>, %arg4: memref<1x8x384xf32, #tpu.memory_space<vmem>>, %arg5: memref<128x384xbf16, #tpu.memory_space<vmem>>) attributes {dimension_semantics = [#tpu.dimension_semantics<parallel>], iteration_bounds = array<i64: 2>, scalar_prefetch = 0 : i64, scratch_operands = 1 : i64, tpu.core_type = #tpu.core_type<tc>, window_params = [{transform_indices = @transform_0, window_bounds = array<i64: 1, 4, 512>}, {pipeline_mode = #tpu.pipeline_mode<synchronous>, transform_indices = @transform_1, window_bounds = array<i64: 8, 128>}, {pipeline_mode = #tpu.pipeline_mode<synchronous>, transform_indices = @transform_2, window_bounds = array<i64: 8, 1>}, {transform_indices = @transform_3, window_bounds = array<i64: 1, 8, 384>}]} {
    %cst = arith.constant 0.000000e+00 : bf16
    %0 = vector.broadcast %cst : bf16 to vector<92x384xbf16>
    %c36 = arith.constant 36 : index
    %c0 = arith.constant 0 : index
    %1 = vector.load %arg5[%c36, %c0] : memref<128x384xbf16, #tpu.memory_space<vmem>>, vector<92x384xbf16>
    tpu.vector_store %arg5[%c36, %c0], %0 {strides = array<i32>} : memref<128x384xbf16, #tpu.memory_space<vmem>>, vector<92x384xbf16>,
    %c0_i32 = arith.constant 0 : i32
    %c0_i32_0 = arith.constant 0 : i32
    %c0_i32_1 = arith.constant 0 : i32
    %2 = tpu.memref_slice %arg1[%c0_i32, %c0_i32_0, %c0_i32_1] : memref<1x4x512xbf16, #tpu.memory_space<vmem>> -> memref<1x4x512xbf16, #tpu.memory_space<vmem>>
    %3 = tpu.memref_squeeze %2 : memref<1x4x512xbf16, #tpu.memory_space<vmem>> -> memref<4x512xbf16, #tpu.memory_space<vmem>>
    %c0_2 = arith.constant 0 : index
    %c0_3 = arith.constant 0 : index
    %4 = vector.load %3[%c0_2, %c0_3] : memref<4x512xbf16, #tpu.memory_space<vmem>>, vector<4x384xbf16>
    %c0_4 = arith.constant 0 : index
    %c0_5 = arith.constant 0 : index
    %5 = vector.load %arg5[%c0_4, %c0_5] : memref<128x384xbf16, #tpu.memory_space<vmem>>, vector<4x384xbf16>
    tpu.vector_store %arg5[%c0_4, %c0_5], %4 {strides = array<i32>} : memref<128x384xbf16, #tpu.memory_space<vmem>>, vector<4x384xbf16>,
    %c0_i32_6 = arith.constant 0 : i32
    %c0_i32_7 = arith.constant 0 : i32
    %c0_i32_8 = arith.constant 0 : i32
    %6 = tpu.memref_slice %arg1[%c0_i32_6, %c0_i32_7, %c0_i32_8] : memref<1x4x512xbf16, #tpu.memory_space<vmem>> -> memref<1x4x512xbf16, #tpu.memory_space<vmem>>
    %7 = tpu.memref_squeeze %6 : memref<1x4x512xbf16, #tpu.memory_space<vmem>> -> memref<4x512xbf16, #tpu.memory_space<vmem>>
    %c0_9 = arith.constant 0 : index
    %c1 = arith.constant 1 : index
    %8 = vector.load %7[%c0_9, %c1] : memref<4x512xbf16, #tpu.memory_space<vmem>>, vector<4x384xbf16>
    %c4 = arith.constant 4 : index
    %c0_10 = arith.constant 0 : index
    %9 = vector.load %arg5[%c4, %c0_10] : memref<128x384xbf16, #tpu.memory_space<vmem>>, vector<4x384xbf16>
    tpu.vector_store %arg5[%c4, %c0_10], %8 {strides = array<i32>} : memref<128x384xbf16, #tpu.memory_space<vmem>>, vector<4x384xbf16>,
    %c0_i32_11 = arith.constant 0 : i32
    %c0_i32_12 = arith.constant 0 : i32
    %c0_i32_13 = arith.constant 0 : i32
    %10 = tpu.memref_slice %arg1[%c0_i32_11, %c0_i32_12, %c0_i32_13] : memref<1x4x512xbf16, #tpu.memory_space<vmem>> -> memref<1x4x512xbf16, #tpu.memory_space<vmem>>
    %11 = tpu.memref_squeeze %10 : memref<1x4x512xbf16, #tpu.memory_space<vmem>> -> memref<4x512xbf16, #tpu.memory_space<vmem>>
    %c0_14 = arith.constant 0 : index
    %c2 = arith.constant 2 : index
    %12 = vector.load %11[%c0_14, %c2] : memref<4x512xbf16, #tpu.memory_space<vmem>>, vector<4x384xbf16>
    %c8 = arith.constant 8 : index
    %c0_15 = arith.constant 0 : index
    %13 = vector.load %arg5[%c8, %c0_15] : memref<128x384xbf16, #tpu.memory_space<vmem>>, vector<4x384xbf16>
    tpu.vector_store %arg5[%c8, %c0_15], %12 {strides = array<i32>} : memref<128x384xbf16, #tpu.memory_space<vmem>>, vector<4x384xbf16>,
    %c0_i32_16 = arith.constant 0 : i32
    %c0_i32_17 = arith.constant 0 : i32
    %c0_i32_18 = arith.constant 0 : i32
    %14 = tpu.memref_slice %arg1[%c0_i32_16, %c0_i32_17, %c0_i32_18] : memref<1x4x512xbf16, #tpu.memory_space<vmem>> -> memref<1x4x512xbf16, #tpu.memory_space<vmem>>
    %15 = tpu.memref_squeeze %14 : memref<1x4x512xbf16, #tpu.memory_space<vmem>> -> memref<4x512xbf16, #tpu.memory_space<vmem>>
    %c0_19 = arith.constant 0 : index
    %c18 = arith.constant 18 : index
    %16 = vector.load %15[%c0_19, %c18] : memref<4x512xbf16, #tpu.memory_space<vmem>>, vector<4x384xbf16>
    %c12 = arith.constant 12 : index
    %c0_20 = arith.constant 0 : index
    %17 = vector.load %arg5[%c12, %c0_20] : memref<128x384xbf16, #tpu.memory_space<vmem>>, vector<4x384xbf16>
    tpu.vector_store %arg5[%c12, %c0_20], %16 {strides = array<i32>} : memref<128x384xbf16, #tpu.memory_space<vmem>>, vector<4x384xbf16>,
    %c0_i32_21 = arith.constant 0 : i32
    %c0_i32_22 = arith.constant 0 : i32
    %c0_i32_23 = arith.constant 0 : i32
    %18 = tpu.memref_slice %arg1[%c0_i32_21, %c0_i32_22, %c0_i32_23] : memref<1x4x512xbf16, #tpu.memory_space<vmem>> -> memref<1x4x512xbf16, #tpu.memory_space<vmem>>
    %19 = tpu.memref_squeeze %18 : memref<1x4x512xbf16, #tpu.memory_space<vmem>> -> memref<4x512xbf16, #tpu.memory_space<vmem>>
    %c0_24 = arith.constant 0 : index
    %c19 = arith.constant 19 : index
    %20 = vector.load %19[%c0_24, %c19] : memref<4x512xbf16, #tpu.memory_space<vmem>>, vector<4x384xbf16>
    %c16 = arith.constant 16 : index
    %c0_25 = arith.constant 0 : index
    %21 = vector.load %arg5[%c16, %c0_25] : memref<128x384xbf16, #tpu.memory_space<vmem>>, vector<4x384xbf16>
    tpu.vector_store %arg5[%c16, %c0_25], %20 {strides = array<i32>} : memref<128x384xbf16, #tpu.memory_space<vmem>>, vector<4x384xbf16>,
    %c0_i32_26 = arith.constant 0 : i32
    %c0_i32_27 = arith.constant 0 : i32
    %c0_i32_28 = arith.constant 0 : i32
    %22 = tpu.memref_slice %arg1[%c0_i32_26, %c0_i32_27, %c0_i32_28] : memref<1x4x512xbf16, #tpu.memory_space<vmem>> -> memref<1x4x512xbf16, #tpu.memory_space<vmem>>
    %23 = tpu.memref_squeeze %22 : memref<1x4x512xbf16, #tpu.memory_space<vmem>> -> memref<4x512xbf16, #tpu.memory_space<vmem>>
    %c0_29 = arith.constant 0 : index
    %c20 = arith.constant 20 : index
    %24 = vector.load %23[%c0_29, %c20] : memref<4x512xbf16, #tpu.memory_space<vmem>>, vector<4x384xbf16>
    %c20_30 = arith.constant 20 : index
    %c0_31 = arith.constant 0 : index
    %25 = vector.load %arg5[%c20_30, %c0_31] : memref<128x384xbf16, #tpu.memory_space<vmem>>, vector<4x384xbf16>
    tpu.vector_store %arg5[%c20_30, %c0_31], %24 {strides = array<i32>} : memref<128x384xbf16, #tpu.memory_space<vmem>>, vector<4x384xbf16>,
    %c0_i32_32 = arith.constant 0 : i32
    %c0_i32_33 = arith.constant 0 : i32
    %c0_i32_34 = arith.constant 0 : i32
    %26 = tpu.memref_slice %arg1[%c0_i32_32, %c0_i32_33, %c0_i32_34] : memref<1x4x512xbf16, #tpu.memory_space<vmem>> -> memref<1x4x512xbf16, #tpu.memory_space<vmem>>
    %27 = tpu.memref_squeeze %26 : memref<1x4x512xbf16, #tpu.memory_space<vmem>> -> memref<4x512xbf16, #tpu.memory_space<vmem>>
    %c0_35 = arith.constant 0 : index
    %c36_36 = arith.constant 36 : index
    %28 = vector.load %27[%c0_35, %c36_36] : memref<4x512xbf16, #tpu.memory_space<vmem>>, vector<4x384xbf16>
    %c24 = arith.constant 24 : index
    %c0_37 = arith.constant 0 : index
    %29 = vector.load %arg5[%c24, %c0_37] : memref<128x384xbf16, #tpu.memory_space<vmem>>, vector<4x384xbf16>
    tpu.vector_store %arg5[%c24, %c0_37], %28 {strides = array<i32>} : memref<128x384xbf16, #tpu.memory_space<vmem>>, vector<4x384xbf16>,
    %c0_i32_38 = arith.constant 0 : i32
    %c0_i32_39 = arith.constant 0 : i32
    %c0_i32_40 = arith.constant 0 : i32
    %30 = tpu.memref_slice %arg1[%c0_i32_38, %c0_i32_39, %c0_i32_40] : memref<1x4x512xbf16, #tpu.memory_space<vmem>> -> memref<1x4x512xbf16, #tpu.memory_space<vmem>>
    %31 = tpu.memref_squeeze %30 : memref<1x4x512xbf16, #tpu.memory_space<vmem>> -> memref<4x512xbf16, #tpu.memory_space<vmem>>
    %c0_41 = arith.constant 0 : index
    %c37 = arith.constant 37 : index
    %32 = vector.load %31[%c0_41, %c37] : memref<4x512xbf16, #tpu.memory_space<vmem>>, vector<4x384xbf16>
    %c28 = arith.constant 28 : index
    %c0_42 = arith.constant 0 : index
    %33 = vector.load %arg5[%c28, %c0_42] : memref<128x384xbf16, #tpu.memory_space<vmem>>, vector<4x384xbf16>
    tpu.vector_store %arg5[%c28, %c0_42], %32 {strides = array<i32>} : memref<128x384xbf16, #tpu.memory_space<vmem>>, vector<4x384xbf16>,
    %c0_i32_43 = arith.constant 0 : i32
    %c0_i32_44 = arith.constant 0 : i32
    %c0_i32_45 = arith.constant 0 : i32
    %34 = tpu.memref_slice %arg1[%c0_i32_43, %c0_i32_44, %c0_i32_45] : memref<1x4x512xbf16, #tpu.memory_space<vmem>> -> memref<1x4x512xbf16, #tpu.memory_space<vmem>>
    %35 = tpu.memref_squeeze %34 : memref<1x4x512xbf16, #tpu.memory_space<vmem>> -> memref<4x512xbf16, #tpu.memory_space<vmem>>
    %c0_46 = arith.constant 0 : index
    %c38 = arith.constant 38 : index
    %36 = vector.load %35[%c0_46, %c38] : memref<4x512xbf16, #tpu.memory_space<vmem>>, vector<4x384xbf16>
    %c32 = arith.constant 32 : index
    %c0_47 = arith.constant 0 : index
    %37 = vector.load %arg5[%c32, %c0_47] : memref<128x384xbf16, #tpu.memory_space<vmem>>, vector<4x384xbf16>
    tpu.vector_store %arg5[%c32, %c0_47], %36 {strides = array<i32>} : memref<128x384xbf16, #tpu.memory_space<vmem>>, vector<4x384xbf16>,
    %c0_48 = arith.constant 0 : index
    %c0_49 = arith.constant 0 : index
    %38 = vector.load %arg2[%c0_48, %c0_49] : memref<8x128xbf16, #tpu.memory_space<vmem>>, vector<8x128xbf16>
    %c0_50 = arith.constant 0 : index
    %c0_51 = arith.constant 0 : index
    %39 = vector.load %arg5[%c0_50, %c0_51] : memref<128x384xbf16, #tpu.memory_space<vmem>>, vector<128x384xbf16>
    %cst_52 = arith.constant dense<0.000000e+00> : vector<8x384xf32>
    %40 = tpu.matmul %38, %39, %cst_52 {dimension_numbers = #tpu.dot_dimension_numbers<[1], [0], [0], [1], [0, 0, 1, 1], [], []>} : vector<8x128xbf16>, vector<128x384xbf16>, vector<8x384xf32> -> vector<8x384xf32>
    %c0_53 = arith.constant 0 : index
    %c0_54 = arith.constant 0 : index
    %41 = vector.load %arg3[%c0_53, %c0_54] : memref<8x1xf32, #tpu.memory_space<vmem>>, vector<8x1xf32>
    %42 = vector.broadcast %41 : vector<8x1xf32> to vector<8x384xf32>
    %43 = arith.addf %40, %42 : vector<8x384xf32>
    %c0_55 = arith.constant 0 : index
    %c0_56 = arith.constant 0 : index
    %c0_57 = arith.constant 0 : index
    %44 = vector.load %arg4[%c0_55, %c0_56, %c0_57] : memref<1x8x384xf32, #tpu.memory_space<vmem>>, vector<1x8x384xf32>
    %45 = vector.shape_cast %44 : vector<1x8x384xf32> to vector<8x384xf32>
    %46 = vector.shape_cast %43 : vector<8x384xf32> to vector<1x8x384xf32>
    tpu.vector_store %arg4[%c0_55, %c0_56, %c0_57], %46 {strides = array<i32>} : memref<1x8x384xf32, #tpu.memory_space<vmem>>, vector<1x8x384xf32>,
    return
  }
  func.func @transform_0(%arg0: i32) -> (i32, i32, i32) {
    %c0_i32 = arith.constant 0 : i32
    %c0_i32_0 = arith.constant 0 : i32
    %c0_i32_1 = arith.constant 0 : i32
    return %arg0, %c0_i32, %c0_i32_0 : i32, i32, i32
  }
  func.func @transform_1(%arg0: i32) -> (i32, i32) {
    %c0_i32 = arith.constant 0 : i32
    %c0_i32_0 = arith.constant 0 : i32
    %c0_i32_1 = arith.constant 0 : i32
    return %c0_i32, %c0_i32_0 : i32, i32
  }
  func.func @transform_2(%arg0: i32) -> (i32, i32) {
    %c0_i32 = arith.constant 0 : i32
    %c0_i32_0 = arith.constant 0 : i32
    %c0_i32_1 = arith.constant 0 : i32
    return %c0_i32, %c0_i32_0 : i32, i32
  }
  func.func @transform_3(%arg0: i32) -> (i32, i32, i32) {
    %c0_i32 = arith.constant 0 : i32
    %c0_i32_0 = arith.constant 0 : i32
    %c0_i32_1 = arith.constant 0 : i32
    return %arg0, %c0_i32, %c0_i32_0 : i32, i32, i32
  }
}

</mosaic_0001>

<llo_original>
// kernel: tpu_custom_call.1
$region0: #{tpu_custom_call.1}
  #allocation0 [shape = 'u32[]', space=smem, size = 0x4, offset = 0x4, fixed_abs, tag = 'smem constant byte address 0x4 - core index']
  #allocation1 [shape = 'u32[144,128]{1,0:T(1,128)}', space=vmem, size = 0x12000, scoped, tag = 'internal scratch']
  #allocation2 [shape = 'bf16[128,384]{1,0:T(16,128)(2,1)}', space=vmem, size = 0x18000, scoped, tag = 'scratch operand']
  %s0 = inlined_call_operand.hbm [shape: bf16[2,4,512], index: 0, kind: input, shape index: {}]
  %s1 = inlined_call_operand.vmem [shape: bf16[8,128], index: 1, kind: input, shape index: {}]
  %s2 = inlined_call_operand.vmem [shape: f32[8,1], index: 2, kind: input, shape index: {}]
  %s3 = inlined_call_operand.hbm [shape: f32[2,8,384], index: 3, kind: output, shape index: {}]
  %s4 = sld [smem:[#allocation0]]
  $region49: #{tpu_custom_call.1} parent=0
    _
  %s6 = ssub.s32 1, %s4
  %s7 = scalar_select 0, %s6, %s4
  $region1: #{tpu_custom_call.1} parent=0
    #allocation3 [shape = 'u8[8192]{0}', space=vmem, size = 0x2000, scoped, tag = 'input window, operand 0']
    #allocation4 [shape = 's32[2]{0}', space=sflag, size = 0x8, scoped, tag = 'scoped memory for tpu_custom_call.1']
    #allocation5 [shape = 's32[2]{0}', space=sflag, size = 0x8, scoped, tag = 'scoped memory for tpu_custom_call.1']
    #allocation6 [shape = 'u8[24576]{0}', space=vmem, size = 0x6000, scoped, tag = 'output window, operand 0']
    %8 = vsyncpa [#allocation4], 0
    %s9 = scalar_lea.sflag [#allocation4], 1
    %10 = vsyncpa %s9, 0
    %11 = vsyncpa [#allocation5], 0
    %s12 = scalar_lea.sflag [#allocation5], 1
    %13 = vsyncpa %s12, 0
    loop: start=0, step=1, limit=4
    $region2: #{tpu_custom_call.1} parent=1 // loop_pre_header
      _
    $region3: #{tpu_custom_call.1} parent=1 // loop_header
      %s15 = sphi 0, %s19
      %p16 = scmp.ge.s32.totalorder %s15, 4
      %s25 = sphi 0, %s27
      %s28 = sphi 0, %s25
      %s29 = sphi 0, %s28
      %s45 = sphi 0, %s29
      %s49 = sphi 0, %s49
      %s51 = sphi 0, %s49
      %s52 = sphi 0, %s51
      %s66 = sphi 0, %s52
      %s70 = sphi 0, %s70
      %s72 = sphi 0, %s70
      %s73 = sphi 0, %s72
      %s87 = sphi 0, %s73
      %s93 = sphi 0, %s95
      %s96 = sphi 0, %s93
      %s97 = sphi 0, %s96
      %s113 = sphi 0, %s97
    $region4: #{tpu_custom_call.1} parent=1 // loop_header_branch
      %18 = sbr.rel (%p16) target = $region8
    $region5: #{tpu_custom_call.1} parent=1 // loop_body
      %s20 = ssub.s32 %s15, 1
      %s21 = ssub.s32 %s15, 2
      %s22 = sadd.s32 %s15, 1
      %s23 = ssub.s32 %s15, %s22
      %p24 = scmp.eq.s32.totalorder %s23, 0
      %s26 = sadd.s32 %s25, 1
      %s27 = scalar_select %p24, %s25, %s26
      %p30 = pneg %p24
      %p31 = scmp.eq.s32.totalorder %s15, 1
      %p32 = por %p30, %p31
      %p33 = scmp.ne.s32.totalorder %s25, %s28
      %p34 = scmp.eq.s32.totalorder %s15, 0
      %p35 = por %p33, %p34
      %p36 = scmp.ne.s32.totalorder %s25, %s28
      %p37 = scmp.eq.s32.totalorder %s20, 1
      %p38 = por %p36, %p37
      %p39 = scmp.ne.s32.totalorder %s28, %s29
      %p40 = scmp.eq.s32.totalorder %s20, 0
      %p41 = por %p39, %p40
      %p42 = scmp.ne.s32.totalorder %s28, %s29
      %p43 = scmp.eq.s32.totalorder %s21, 1
      %p44 = por %p42, %p43
      %p46 = scmp.ne.s32.totalorder %s29, %s45
      %p47 = scmp.eq.s32.totalorder %s21, 0
      %p48 = por %p46, %p47
      %s50 = sadd.s32 %s49, 1
      %p53 = scmp.eq.s32.totalorder %s15, 1
      %p54 = scmp.ne.s32.totalorder %s49, %s51
      %p55 = scmp.eq.s32.totalorder %s15, 0
      %p56 = por %p54, %p55
      %p57 = scmp.ne.s32.totalorder %s49, %s51
      %p58 = scmp.eq.s32.totalorder %s20, 1
      %p59 = por %p57, %p58
      %p60 = scmp.ne.s32.totalorder %s51, %s52
      %p61 = scmp.eq.s32.totalorder %s20, 0
      %p62 = por %p60, %p61
      %p63 = scmp.ne.s32.totalorder %s51, %s52
      %p64 = scmp.eq.s32.totalorder %s21, 1
      %p65 = por %p63, %p64
      %p67 = scmp.ne.s32.totalorder %s52, %s66
      %p68 = scmp.eq.s32.totalorder %s21, 0
      %p69 = por %p67, %p68
      %s71 = sadd.s32 %s70, 1
      %p74 = scmp.eq.s32.totalorder %s15, 1
      %p75 = scmp.ne.s32.totalorder %s70, %s72
      %p76 = scmp.eq.s32.totalorder %s15, 0
      %p77 = por %p75, %p76
      %p78 = scmp.ne.s32.totalorder %s70, %s72
      %p79 = scmp.eq.s32.totalorder %s20, 1
      %p80 = por %p78, %p79
      %p81 = scmp.ne.s32.totalorder %s72, %s73
      %p82 = scmp.eq.s32.totalorder %s20, 0
      %p83 = por %p81, %p82
      %p84 = scmp.ne.s32.totalorder %s72, %s73
      %p85 = scmp.eq.s32.totalorder %s21, 1
      %p86 = por %p84, %p85
      %p88 = scmp.ne.s32.totalorder %s73, %s87
      %p89 = scmp.eq.s32.totalorder %s21, 0
      %p90 = por %p88, %p89
      %s91 = ssub.s32 %s15, %s22
      %p92 = scmp.eq.s32.totalorder %s91, 0
      %s94 = sadd.s32 %s93, 1
      %s95 = scalar_select %p92, %s93, %s94
      %p98 = pneg %p92
      %p99 = scmp.eq.s32.totalorder %s15, 1
      %p100 = por %p98, %p99
      %p101 = scmp.ne.s32.totalorder %s93, %s96
      %p102 = scmp.eq.s32.totalorder %s15, 0
      %p103 = por %p101, %p102
      %p104 = scmp.ne.s32.totalorder %s93, %s96
      %p105 = scmp.eq.s32.totalorder %s20, 1
      %p106 = por %p104, %p105
      %p107 = scmp.ne.s32.totalorder %s96, %s97
      %p108 = scmp.eq.s32.totalorder %s20, 0
      %p109 = por %p107, %p108
      %p110 = scmp.ne.s32.totalorder %s96, %s97
      %p111 = scmp.eq.s32.totalorder %s21, 1
      %p112 = por %p110, %p111
      %p114 = scmp.ne.s32.totalorder %s97, %s113
      %p115 = scmp.eq.s32.totalorder %s21, 0
      %p116 = por %p114, %p115
      %p117 = scmp.le.s32.totalorder 1, %s15
      %p118 = scmp.lt.s32.totalorder %s15, 3
      %p119 = pnand %p117, %p118
      %p120 = pneg %p119
      // Predicated region
      $region9: #{tpu_custom_call.1} parent=5 // pred_check
        _
      $region10: #{tpu_custom_call.1} parent=5 // pred_check_branch
        %122 = sbr.rel (%p119) target = $region12
      $region11: #{tpu_custom_call.1} parent=5 // pred_region
        %s123 = ssub.s32 %s15, 1
        // Predicated region
        $region13: #{tpu_custom_call.1} parent=11 // pred_check
          %p124 = pneg %p62
        $region14: #{tpu_custom_call.1} parent=11 // pred_check_branch
          %126 = sbr.rel (%p124) target = $region16
        $region15: #{tpu_custom_call.1} parent=11 // pred_region
          _
        $region16: #{tpu_custom_call.1} parent=11 // pred_fallthru
          _
        // Predicated region
        $region17: #{tpu_custom_call.1} parent=11 // pred_check
          %p127 = pneg %p83
        $region18: #{tpu_custom_call.1} parent=11 // pred_check_branch
          %129 = sbr.rel (%p127) target = $region20
        $region19: #{tpu_custom_call.1} parent=11 // pred_region
          _
        $region20: #{tpu_custom_call.1} parent=11 // pred_fallthru
          _
      $region12: #{tpu_custom_call.1} parent=5 // pred_fallthru
        _
      %p130 = scmp.lt.s32.totalorder %s15, 2
      // Predicated region
      $region21: #{tpu_custom_call.1} parent=5 // pred_check
        %p131 = pneg %p130
      $region22: #{tpu_custom_call.1} parent=5 // pred_check_branch
        %133 = sbr.rel (%p131) target = $region24
      $region23: #{tpu_custom_call.1} parent=5 // pred_region
        // Predicated region
        $region25: #{tpu_custom_call.1} parent=23 // pred_check
          %p134 = pneg %p35
        $region26: #{tpu_custom_call.1} parent=23 // pred_check_branch
          %136 = sbr.rel (%p134) target = $region28
        $region27: #{tpu_custom_call.1} parent=23 // pred_region
          %s137 = sand.u32 %s25, 1
          %s138 = scalar_lea.sflag [#allocation4], %s137
          %s139 = sand.u32 %s25, 1
          %s140 = smul.addr %s139, 8
          %s141 = scalar_lea.vmem [#allocation3], %s140
          %s143 = ssub.s32 128, 128
          %144 = vsyncadd %s138, %s143
          %s145 = smul.addr %s15, 4
          %s146 = smul.addr %s145, 32
          %s147 = scalar_lea.hbm %s0, %s146
          %s149 = sshll.u32 %s141, 4
          %s150 = int_to_ptr.vmem [resolvable:$true] %s149
          %152 = dma.hbm_to_vmem [thread:$0]  %s147, 128, %s150, %s138
        $region28: #{tpu_custom_call.1} parent=23 // pred_fallthru
          _
      $region24: #{tpu_custom_call.1} parent=5 // pred_fallthru
        _
      %p153 = scmp.le.s32.totalorder 1, %s15
      %p154 = scmp.lt.s32.totalorder %s15, 3
      %p155 = pnand %p153, %p154
      %p156 = pneg %p155
      // Predicated region
      $region29: #{tpu_custom_call.1} parent=5 // pred_check
        _
      $region30: #{tpu_custom_call.1} parent=5 // pred_check_branch
        %158 = sbr.rel (%p155) target = $region32
      $region31: #{tpu_custom_call.1} parent=5 // pred_region
        %s159 = ssub.s32 %s15, 1
        %s160 = sand.u32 %s28, 1
        %s161 = scalar_lea.sflag [#allocation4], %s160
        %s162 = sand.u32 %s28, 1
        %s163 = smul.addr %s162, 8
        %s164 = scalar_lea.vmem [#allocation3], %s163
        // Predicated region
        $region33: #{tpu_custom_call.1} parent=31 // pred_check
          %p165 = pneg %p41
        $region34: #{tpu_custom_call.1} parent=31 // pred_check_branch
          %167 = sbr.rel (%p165) target = $region36
        $region35: #{tpu_custom_call.1} parent=31 // pred_region
          %168 = dma.done %s161, 128
        $region36: #{tpu_custom_call.1} parent=31 // pred_fallthru
          _
        %s169 = sand.u32 %s28, 1
        %s170 = scalar_lea.sflag [#allocation4], %s169
        %s171 = sand.u32 %s28, 1
        %s172 = smul.addr %s171, 8
        %s173 = scalar_lea.vmem [#allocation3], %s172
        %p174 = pneg %p41
        %p175 = pneg %p38
        %p176 = pneg %p62
        %p177 = pneg %p59
        %p178 = pneg %p83
        %p179 = pneg %p80
        %p180 = pneg %p109
        %p181 = pneg %p106
        %s182 = sand.u32 %s96, 1
        %s183 = scalar_lea.sflag [#allocation5], %s182
        %s184 = sand.u32 %s96, 1
        %s185 = smul.addr %s184, 24
        %s186 = scalar_lea.vmem [#allocation6], %s185
        %188 = vst [vmem:[#allocation2 + $0x30] sm:$0xfc] 0
        %189 = vst [vmem:[#allocation2 + $0x38] sm:$0xfc] 0
        %190 = vst [vmem:[#allocation2 + $0x40] sm:$0xfc] 0
        %191 = vst [vmem:[#allocation2 + $0x48] sm:$0xff] 0
        %192 = vst [vmem:[#allocation2 + $0x50] sm:$0xff] 0
        %193 = vst [vmem:[#allocation2 + $0x58] sm:$0xff] 0
        %194 = vst [vmem:[#allocation2 + $0x60] sm:$0xff] 0
        %195 = vst [vmem:[#allocation2 + $0x68] sm:$0xff] 0
        %196 = vst [vmem:[#allocation2 + $0x70] sm:$0xff] 0
        %197 = vst [vmem:[#allocation2 + $0x78] sm:$0xff] 0
        %198 = vst [vmem:[#allocation2 + $0x80] sm:$0xff] 0
        %199 = vst [vmem:[#allocation2 + $0x88] sm:$0xff] 0
        %200 = vst [vmem:[#allocation2 + $0x90] sm:$0xff] 0
        %201 = vst [vmem:[#allocation2 + $0x98] sm:$0xff] 0
        %202 = vst [vmem:[#allocation2 + $0xa0] sm:$0xff] 0
        %203 = vst [vmem:[#allocation2 + $0xa8] sm:$0xff] 0
        %204 = vst [vmem:[#allocation2 + $0xb0] sm:$0xff] 0
        %205 = vst [vmem:[#allocation2 + $0xb8] sm:$0xff] 0
        %v206 = vld [vmem:[%s164] sm:$0x3f]
        %v208 = vcombine.high %v206, %v206
        %v210 = vunpack.c.l.s4 1983009808
        %v211 = vunpack.c.0.s8 %v210
        %v212 = vlaneseq
        %v213 = vshrl.u32 %v212, 7
        %v214 = vsub.s32 %v211, %v213
        %v215 = vrot.slane %v206, %v214
        %v217 = vunpack.c.l.s4 1983009808
        %v218 = vunpack.c.0.s8 %v217
        %v219 = vlaneseq
        %v220 = vshrl.u32 %v219, 7
        %v221 = vsub.s32 %v218, %v220
        %v222 = vrot.slane %v208, %v221
        %v223 = vcombine.high %v215, %v215
        %227 = vst [vmem:[#allocation2] sm:$0x3] %v215
        %228 = vst [vmem:[#allocation2 + $0x8] sm:$0x3] %v223
        %229 = vst [vmem:[#allocation2 + $0x10] sm:$0x3] %v222
        %v230 = vld [vmem:[%s164] sm:$0xff]
        %v232 = vcombine.low %v230, %v230
        %v234 = vunpack.c.l.s4 1983009808
        %v235 = vunpack.c.0.s8 %v234
        %v236 = vlaneseq
        %v237 = vshrl.u32 %v236, 7
        %v238 = vsub.s32 %v235, %v237
        %v239 = vrot.slane %v232, %v238
        %v241 = vunpack.c.l.s4 1983009808
        %v242 = vunpack.c.0.s8 %v241
        %v243 = vlaneseq
        %v244 = vshrl.u32 %v243, 7
        %v245 = vsub.s32 %v242, %v244
        %v246 = vrot.slane %v230, %v245
        %v247 = vcombine.high %v239, %v239
        %v248 = vcombine.high %v246, %v246
        %249 = vrot.lane.b32.xlu0 %v239, 127
        %v250 = vpop.permute.xlu0 %249
        %251 = vrot.lane.b32.xlu0 %v247, 127
        %v252 = vpop.permute.xlu0 %251
        %253 = vrot.lane.b32.xlu0 %v246, 127
        %v254 = vpop.permute.xlu0 %253
        %255 = vrot.lane.b32.xlu0 %v248, 127
        %v256 = vpop.permute.xlu0 %255
        %vm257 = vcmask 1039360
        %v258 = vsel %vm257, %v250, %v252
        %v259 = vsel %vm257, %v252, %v254
        %v260 = vsel %vm257, %v254, %v256
        %264 = vst [vmem:[#allocation2] sm:$0xc] %v258
        %265 = vst [vmem:[#allocation2 + $0x8] sm:$0xc] %v259
        %266 = vst [vmem:[#allocation2 + $0x10] sm:$0xc] %v260
        %v267 = vld [vmem:[%s164] sm:$0xff]
        %v269 = vcombine.high %v267, %v267
        %v271 = vunpack.c.l.s4 1983009808
        %v272 = vunpack.c.0.s8 %v271
        %v273 = vlaneseq
        %v274 = vshrl.u32 %v273, 7
        %v275 = vsub.s32 %v272, %v274
        %v276 = vrot.slane %v267, %v275
        %v278 = vunpack.c.l.s4 1983009808
        %v279 = vunpack.c.0.s8 %v278
        %v280 = vlaneseq
        %v281 = vshrl.u32 %v280, 7
        %v282 = vsub.s32 %v279, %v281
        %v283 = vrot.slane %v269, %v282
        %v284 = vcombine.low %v276, %v276
        %v285 = vcombine.low %v283, %v283
        %286 = vrot.lane.b32.xlu0 %v284, 126
        %v287 = vpop.permute.xlu0 %286
        %288 = vrot.lane.b32.xlu0 %v276, 126
        %v289 = vpop.permute.xlu0 %288
        %290 = vrot.lane.b32.xlu0 %v285, 126
        %v291 = vpop.permute.xlu0 %290
        %292 = vrot.lane.b32.xlu0 %v283, 126
        %v293 = vpop.permute.xlu0 %292
        %vm294 = vcmask 1031168
        %v295 = vsel %vm294, %v287, %v289
        %v296 = vsel %vm294, %v289, %v291
        %v297 = vsel %vm294, %v291, %v293
        %301 = vst [vmem:[#allocation2] sm:$0x30] %v295
        %302 = vst [vmem:[#allocation2 + $0x8] sm:$0x30] %v296
        %303 = vst [vmem:[#allocation2 + $0x10] sm:$0x30] %v297
        %v304 = vld [vmem:[%s164] sm:$0xff]
        %v306 = vcombine.low %v304, %v304
        %v308 = vunpack.c.l.s4 1983009808
        %v309 = vunpack.c.0.s8 %v308
        %v310 = vlaneseq
        %v311 = vshrl.u32 %v310, 7
        %v312 = vsub.s32 %v309, %v311
        %v313 = vrot.slane %v306, %v312
        %v315 = vunpack.c.l.s4 1983009808
        %v316 = vunpack.c.0.s8 %v315
        %v317 = vlaneseq
        %v318 = vshrl.u32 %v317, 7
        %v319 = vsub.s32 %v316, %v318
        %v320 = vrot.slane %v304, %v319
        %v321 = vcombine.low %v313, %v313
        %v322 = vcombine.low %v320, %v320
        %323 = vrot.lane.b32.xlu0 %v321, 110
        %v324 = vpop.permute.xlu0 %323
        %325 = vrot.lane.b32.xlu0 %v313, 110
        %v326 = vpop.permute.xlu0 %325
        %327 = vrot.lane.b32.xlu0 %v322, 110
        %v328 = vpop.permute.xlu0 %327
        %329 = vrot.lane.b32.xlu0 %v320, 110
        %v330 = vpop.permute.xlu0 %329
        %vm331 = vcmask 900096
        %v332 = vsel %vm331, %v324, %v326
        %v333 = vsel %vm331, %v326, %v328
        %v334 = vsel %vm331, %v328, %v330
        %338 = vst [vmem:[#allocation2] sm:$0xc0] %v332
        %339 = vst [vmem:[#allocation2 + $0x8] sm:$0xc0] %v333
        %340 = vst [vmem:[#allocation2 + $0x10] sm:$0xc0] %v334
        %v341 = vld [vmem:[%s164] sm:$0xff]
        %v343 = vcombine.high %v341, %v341
        %v345 = vunpack.c.l.s4 1983009808
        %v346 = vunpack.c.0.s8 %v345
        %v347 = vlaneseq
        %v348 = vshrl.u32 %v347, 7
        %v349 = vsub.s32 %v346, %v348
        %v350 = vrot.slane %v341, %v349
        %v352 = vunpack.c.l.s4 1983009808
        %v353 = vunpack.c.0.s8 %v352
        %v354 = vlaneseq
        %v355 = vshrl.u32 %v354, 7
        %v356 = vsub.s32 %v353, %v355
        %v357 = vrot.slane %v343, %v356
        %v358 = vcombine.high %v350, %v350
        %v359 = vcombine.high %v357, %v357
        %360 = vrot.lane.b32.xlu0 %v350, 109
        %v361 = vpop.permute.xlu0 %360
        %362 = vrot.lane.b32.xlu0 %v358, 109
        %v363 = vpop.permute.xlu0 %362
        %364 = vrot.lane.b32.xlu0 %v357, 109
        %v365 = vpop.permute.xlu0 %364
        %366 = vrot.lane.b32.xlu0 %v359, 109
        %v367 = vpop.permute.xlu0 %366
        %vm368 = vcmask 891904
        %v369 = vsel %vm368, %v361, %v363
        %v370 = vsel %vm368, %v363, %v365
        %v371 = vsel %vm368, %v365, %v367
        %375 = vst [vmem:[#allocation2 + $0x18] sm:$0x3] %v369
        %376 = vst [vmem:[#allocation2 + $0x20] sm:$0x3] %v370
        %377 = vst [vmem:[#allocation2 + $0x28] sm:$0x3] %v371
        %v378 = vld [vmem:[%s164] sm:$0xff]
        %v380 = vcombine.low %v378, %v378
        %v382 = vunpack.c.l.s4 1983009808
        %v383 = vunpack.c.0.s8 %v382
        %v384 = vlaneseq
        %v385 = vshrl.u32 %v384, 7
        %v386 = vsub.s32 %v383, %v385
        %v387 = vrot.slane %v380, %v386
        %v389 = vunpack.c.l.s4 1983009808
        %v390 = vunpack.c.0.s8 %v389
        %v391 = vlaneseq
        %v392 = vshrl.u32 %v391, 7
        %v393 = vsub.s32 %v390, %v392
        %v394 = vrot.slane %v378, %v393
        %v395 = vcombine.high %v387, %v387
        %v396 = vcombine.high %v394, %v394
        %397 = vrot.lane.b32.xlu0 %v387, 108
        %v398 = vpop.permute.xlu0 %397
        %399 = vrot.lane.b32.xlu0 %v395, 108
        %v400 = vpop.permute.xlu0 %399
        %401 = vrot.lane.b32.xlu0 %v394, 108
        %v402 = vpop.permute.xlu0 %401
        %403 = vrot.lane.b32.xlu0 %v396, 108
        %v404 = vpop.permute.xlu0 %403
        %vm405 = vcmask 883712
        %v406 = vsel %vm405, %v398, %v400
        %v407 = vsel %vm405, %v400, %v402
        %v408 = vsel %vm405, %v402, %v404
        %412 = vst [vmem:[#allocation2 + $0x18] sm:$0xc] %v406
        %413 = vst [vmem:[#allocation2 + $0x20] sm:$0xc] %v407
        %414 = vst [vmem:[#allocation2 + $0x28] sm:$0xc] %v408
        %v415 = vld [vmem:[%s164] sm:$0xff]
        %v417 = vcombine.high %v415, %v415
        %v419 = vunpack.c.l.s4 1983009808
        %v420 = vunpack.c.0.s8 %v419
        %v421 = vlaneseq
        %v422 = vshrl.u32 %v421, 7
        %v423 = vsub.s32 %v420, %v422
        %v424 = vrot.slane %v415, %v423
        %v426 = vunpack.c.l.s4 1983009808
        %v427 = vunpack.c.0.s8 %v426
        %v428 = vlaneseq
        %v429 = vshrl.u32 %v428, 7
        %v430 = vsub.s32 %v427, %v429
        %v431 = vrot.slane %v417, %v430
        %v432 = vcombine.low %v424, %v424
        %v433 = vcombine.low %v431, %v431
        %434 = vrot.lane.b32.xlu0 %v432, 92
        %v435 = vpop.permute.xlu0 %434
        %436 = vrot.lane.b32.xlu0 %v424, 92
        %v437 = vpop.permute.xlu0 %436
        %438 = vrot.lane.b32.xlu0 %v433, 92
        %v439 = vpop.permute.xlu0 %438
        %440 = vrot.lane.b32.xlu0 %v431, 92
        %v441 = vpop.permute.xlu0 %440
        %vm442 = vcmask 752640
        %v443 = vsel %vm442, %v435, %v437
        %v444 = vsel %vm442, %v437, %v439
        %v445 = vsel %vm442, %v439, %v441
        %449 = vst [vmem:[#allocation2 + $0x18] sm:$0x30] %v443
        %450 = vst [vmem:[#allocation2 + $0x20] sm:$0x30] %v444
        %451 = vst [vmem:[#allocation2 + $0x28] sm:$0x30] %v445
        %v452 = vld [vmem:[%s164] sm:$0xff]
        %v454 = vcombine.low %v452, %v452
        %v456 = vunpack.c.l.s4 1983009808
        %v457 = vunpack.c.0.s8 %v456
        %v458 = vlaneseq
        %v459 = vshrl.u32 %v458, 7
        %v460 = vsub.s32 %v457, %v459
        %v461 = vrot.slane %v454, %v460
        %v463 = vunpack.c.l.s4 1983009808
        %v464 = vunpack.c.0.s8 %v463
        %v465 = vlaneseq
        %v466 = vshrl.u32 %v465, 7
        %v467 = vsub.s32 %v464, %v466
        %v468 = vrot.slane %v452, %v467
        %v469 = vcombine.low %v461, %v461
        %v470 = vcombine.low %v468, %v468
        %471 = vrot.lane.b32.xlu0 %v469, 91
        %v472 = vpop.permute.xlu0 %471
        %473 = vrot.lane.b32.xlu0 %v461, 91
        %v474 = vpop.permute.xlu0 %473
        %475 = vrot.lane.b32.xlu0 %v470, 91
        %v476 = vpop.permute.xlu0 %475
        %477 = vrot.lane.b32.xlu0 %v468, 91
        %v478 = vpop.permute.xlu0 %477
        %vm479 = vcmask 744448
        %v480 = vsel %vm479, %v472, %v474
        %v481 = vsel %vm479, %v474, %v476
        %v482 = vsel %vm479, %v476, %v478
        %486 = vst [vmem:[#allocation2 + $0x18] sm:$0xc0] %v480
        %487 = vst [vmem:[#allocation2 + $0x20] sm:$0xc0] %v481
        %488 = vst [vmem:[#allocation2 + $0x28] sm:$0xc0] %v482
        %v489 = vld [vmem:[%s164] sm:$0xff]
        %v491 = vcombine.high %v489, %v489
        %v493 = vunpack.c.l.s4 1983009808
        %v494 = vunpack.c.0.s8 %v493
        %v495 = vlaneseq
        %v496 = vshrl.u32 %v495, 7
        %v497 = vsub.s32 %v494, %v496
        %v498 = vrot.slane %v489, %v497
        %v500 = vunpack.c.l.s4 1983009808
        %v501 = vunpack.c.0.s8 %v500
        %v502 = vlaneseq
        %v503 = vshrl.u32 %v502, 7
        %v504 = vsub.s32 %v501, %v503
        %v505 = vrot.slane %v491, %v504
        %v506 = vcombine.high %v498, %v498
        %v507 = vcombine.high %v505, %v505
        %508 = vrot.lane.b32.xlu0 %v498, 90
        %v509 = vpop.permute.xlu0 %508
        %510 = vrot.lane.b32.xlu0 %v506, 90
        %v511 = vpop.permute.xlu0 %510
        %512 = vrot.lane.b32.xlu0 %v505, 90
        %v513 = vpop.permute.xlu0 %512
        %514 = vrot.lane.b32.xlu0 %v507, 90
        %v515 = vpop.permute.xlu0 %514
        %vm516 = vcmask 736256
        %v517 = vsel %vm516, %v509, %v511
        %v518 = vsel %vm516, %v511, %v513
        %v519 = vsel %vm516, %v513, %v515
        %523 = vst [vmem:[#allocation2 + $0x30] sm:$0x3] %v517
        %524 = vst [vmem:[#allocation2 + $0x38] sm:$0x3] %v518
        %525 = vst [vmem:[#allocation2 + $0x40] sm:$0x3] %v519
        %v526 = vld [vmem:[%s1] sm:$0xf]
        %v527 = vld [vmem:[#allocation2] sm:$0xff]
        %v528 = vld [vmem:[#allocation2 + $0x8] sm:$0xff]
        %v529 = vld [vmem:[#allocation2 + $0x10] sm:$0xff]
        %v530 = vld [vmem:[#allocation2 + $0x18] sm:$0xff]
        %v531 = vld [vmem:[#allocation2 + $0x20] sm:$0xff]
        %v532 = vld [vmem:[#allocation2 + $0x28] sm:$0xff]
        %v533 = vld [vmem:[#allocation2 + $0x30] sm:$0xff]
        %v534 = vld [vmem:[#allocation2 + $0x38] sm:$0xff]
        %v535 = vld [vmem:[#allocation2 + $0x40] sm:$0xff]
        %v536 = vld [vmem:[#allocation2 + $0x48] sm:$0xff]
        %v537 = vld [vmem:[#allocation2 + $0x50] sm:$0xff]
        %v538 = vld [vmem:[#allocation2 + $0x58] sm:$0xff]
        %v539 = vld [vmem:[#allocation2 + $0x60] sm:$0xff]
        %v540 = vld [vmem:[#allocation2 + $0x68] sm:$0xff]
        %v541 = vld [vmem:[#allocation2 + $0x70] sm:$0xff]
        %v542 = vld [vmem:[#allocation2 + $0x78] sm:$0xff]
        %v543 = vld [vmem:[#allocation2 + $0x80] sm:$0xff]
        %v544 = vld [vmem:[#allocation2 + $0x88] sm:$0xff]
        %v545 = vld [vmem:[#allocation2 + $0x90] sm:$0xff]
        %v546 = vld [vmem:[#allocation2 + $0x98] sm:$0xff]
        %v547 = vld [vmem:[#allocation2 + $0xa0] sm:$0xff]
        %v548 = vld [vmem:[#allocation2 + $0xa8] sm:$0xff]
        %v549 = vld [vmem:[#allocation2 + $0xb0] sm:$0xff]
        %v550 = vld [vmem:[#allocation2 + $0xb8] sm:$0xff]
        %v551 = vld [vmem:[%s2] sm:$0xff]
        %553 = vset.pattern.permute.xlu0 0
        %554 = vperm.xlu0 %553, %v551
        %v555 = vpop.permute.xlu0 %554
        %557 = vmatprep.subr.bf16.mxu0 %v528
        %558 = vmatpush1.bf16.msra.mxu0 %v527
        %559 = vmatprep.subr.bf16.mxu0 %v531
        %560 = vmatpush1.bf16.msra.mxu0 %v530
        %561 = vmatprep.subr.bf16.mxu0 %v534
        %562 = vmatpush1.bf16.msra.mxu0 %v533
        %563 = vmatprep.subr.bf16.mxu0 %v537
        %564 = vmatpush1.bf16.msra.mxu0 %v536
        %565 = vmatprep.subr.bf16.mxu0 %v540
        %566 = vmatpush1.bf16.msra.mxu0 %v539
        %567 = vmatprep.subr.bf16.mxu0 %v543
        %568 = vmatpush1.bf16.msra.mxu0 %v542
        %569 = vmatprep.subr.bf16.mxu0 %v546
        %570 = vmatpush1.bf16.msra.mxu0 %v545
        %571 = vmatprep.subr.bf16.mxu0 %v549
        %572 = vmatpush1.bf16.msra.mxu0 %v548
        %573 = vmatprep.subr.bf16.mxu0 0
        %574 = vmatpush1.bf16.msra.mxu0 0
        %575 = vmatprep.subr.bf16.mxu0 0
        %576 = vmatpush1.bf16.msra.mxu0 0
        %577 = vmatprep.subr.bf16.mxu0 0
        %578 = vmatpush1.bf16.msra.mxu0 0
        %579 = vmatprep.subr.bf16.mxu0 0
        %580 = vmatpush1.bf16.msra.mxu0 0
        %581 = vmatprep.subr.bf16.mxu0 0
        %582 = vmatpush1.bf16.msra.mxu0 0
        %583 = vmatprep.subr.bf16.mxu0 0
        %584 = vmatpush1.bf16.msra.mxu0 0
        %585 = vmatprep.subr.bf16.mxu0 0
        %586 = vmatpush1.bf16.msra.mxu0 0
        %587 = vmatprep.subr.bf16.mxu0 0
        %588 = vmatpush1.bf16.msra.mxu0 0
        %589 = vmatprep.mubr.bf16.mxu0 0
        %590 = vmatmul.mubr.bf16.gmra.mrb[0].mxu0 %v526
        %v591 = vpop.f32.mrb[0].mxu0
        %v592 = vadd.f32 %v555, %v591
        %v593 = vpop.f32.mrb[0].mxu0
        %v594 = vadd.f32 %v555, %v593
        %v595 = vpop.f32.mrb[0].mxu0
        %v596 = vpop.f32.mrb[0].mxu0
        %597 = vdwg.mxu0
        %598 = vmatprep.subr.bf16.mxu0 0
        %599 = vmatpush1.bf16.msra.mxu0 %v529
        %600 = vmatprep.subr.bf16.mxu0 0
        %601 = vmatpush1.bf16.msra.mxu0 %v532
        %602 = vmatprep.subr.bf16.mxu0 0
        %603 = vmatpush1.bf16.msra.mxu0 %v535
        %604 = vmatprep.subr.bf16.mxu0 0
        %605 = vmatpush1.bf16.msra.mxu0 %v538
        %606 = vmatprep.subr.bf16.mxu0 0
        %607 = vmatpush1.bf16.msra.mxu0 %v541
        %608 = vmatprep.subr.bf16.mxu0 0
        %609 = vmatpush1.bf16.msra.mxu0 %v544
        %610 = vmatprep.subr.bf16.mxu0 0
        %611 = vmatpush1.bf16.msra.mxu0 %v547
        %612 = vmatprep.subr.bf16.mxu0 0
        %613 = vmatpush1.bf16.msra.mxu0 %v550
        %614 = vmatprep.subr.bf16.mxu0 0
        %615 = vmatpush1.bf16.msra.mxu0 0
        %616 = vmatprep.subr.bf16.mxu0 0
        %617 = vmatpush1.bf16.msra.mxu0 0
        %618 = vmatprep.subr.bf16.mxu0 0
        %619 = vmatpush1.bf16.msra.mxu0 0
        %620 = vmatprep.subr.bf16.mxu0 0
        %621 = vmatpush1.bf16.msra.mxu0 0
        %622 = vmatprep.subr.bf16.mxu0 0
        %623 = vmatpush1.bf16.msra.mxu0 0
        %624 = vmatprep.subr.bf16.mxu0 0
        %625 = vmatpush1.bf16.msra.mxu0 0
        %626 = vmatprep.subr.bf16.mxu0 0
        %627 = vmatpush1.bf16.msra.mxu0 0
        %628 = vmatprep.subr.bf16.mxu0 0
        %629 = vmatpush1.bf16.msra.mxu0 0
        %630 = vmatprep.mubr.bf16.mxu0 0
        %631 = vmatmul.mubr.bf16.gmra.mrb[0].mxu0 %v526
        %v632 = vpop.f32.mrb[0].mxu0
        %v633 = vadd.f32 %v555, %v632
        %v634 = vpop.f32.mrb[0].mxu0
        %v635 = vpop.f32.mrb[0].mxu0
        %v636 = vpop.f32.mrb[0].mxu0
        %637 = vdwg.mxu0
        %638 = vst [vmem:[%s186] sm:$0xff] %v592
        %639 = vst [vmem:[%s186 + $0x8] sm:$0xff] %v594
        %640 = vst [vmem:[%s186 + $0x10] sm:$0xff] %v633
        %s641 = sand.u32 %s96, 1
        %s642 = scalar_lea.sflag [#allocation5], %s641
        %s643 = sand.u32 %s96, 1
        %s644 = smul.addr %s643, 24
        %s645 = scalar_lea.vmem [#allocation6], %s644
        // Predicated region
        $region37: #{tpu_custom_call.1} parent=31 // pred_check
          %p646 = pneg %p106
        $region38: #{tpu_custom_call.1} parent=31 // pred_check_branch
          %648 = sbr.rel (%p646) target = $region40
        $region39: #{tpu_custom_call.1} parent=31 // pred_region
          %s650 = ssub.s32 384, 384
          %651 = vsyncadd %s642, %s650
          %s652 = smul.addr %s20, 3
          %s653 = smul.addr %s652, 128
          %s654 = scalar_lea.hbm %s3, %s653
          %s656 = sshll.u32 %s645, 4
          %s657 = int_to_ptr.vmem [resolvable:$true] %s656
          %659 = dma.vmem_to_hbm [thread:$0]  %s657, 384, %s654, %s642
        $region40: #{tpu_custom_call.1} parent=31 // pred_fallthru
          _
      $region32: #{tpu_custom_call.1} parent=5 // pred_fallthru
        _
      %p660 = scmp.le.s32.totalorder 2, %s15
      // Predicated region
      $region41: #{tpu_custom_call.1} parent=5 // pred_check
        %p661 = pneg %p660
      $region42: #{tpu_custom_call.1} parent=5 // pred_check_branch
        %663 = sbr.rel (%p661) target = $region44
      $region43: #{tpu_custom_call.1} parent=5 // pred_region
        %s664 = ssub.s32 %s15, 2
        // Predicated region
        $region45: #{tpu_custom_call.1} parent=43 // pred_check
          %p665 = pneg %p112
        $region46: #{tpu_custom_call.1} parent=43 // pred_check_branch
          %667 = sbr.rel (%p665) target = $region48
        $region47: #{tpu_custom_call.1} parent=43 // pred_region
          %s668 = sand.u32 %s97, 1
          %s669 = scalar_lea.sflag [#allocation5], %s668
          %s670 = sand.u32 %s97, 1
          %s671 = smul.addr %s670, 24
          %s672 = scalar_lea.vmem [#allocation6], %s671
          %673 = dma.done %s669, 384
        $region48: #{tpu_custom_call.1} parent=43 // pred_fallthru
          _
      $region44: #{tpu_custom_call.1} parent=5 // pred_fallthru
        _
    $region6: #{tpu_custom_call.1} parent=1 // loop_footer
      %s19 = sadd.s32 1, %s15
    $region7: #{tpu_custom_call.1} parent=1 // loop_footer_branch
      %14 = sbr.rel target = $region3
    $region8: #{tpu_custom_call.1} parent=1 // loop_exit
      _
    %674 = vsyncpa [#allocation4], 1
    %s675 = scalar_lea.sflag [#allocation4], 1
    %676 = vsyncpa %s675, 1
    %677 = vsyncpa [#allocation5], 1
    %s678 = scalar_lea.sflag [#allocation5], 1
    %679 = vsyncpa %s678, 1

</llo_original>
